<compile_context>
chip_gen: v5e
topology: v5e:2x2
jax: 0.10.0
libtpu: 0.0.40
codegen_flags: <defaults>
</compile_context>

<pallas_src>
import numpy as np
import jax
import jax.numpy as jnp
from jax import lax
from jax.experimental import pallas as pl
from jax.experimental.pallas import tpu as pltpu

# ----- module hyper-parameters (match MCGF(dim=32, heads=8, dim_head=8)) -----
DIM = 32
HEADS = 8
DIM_HEAD = 8
INNER = HEADS * DIM_HEAD        # 64
SCALE = DIM_HEAD ** (-0.5)

# problem sizes for the example run (HEADS*B*N == 128 -> lane-dense scores)
B = 2      # batch
N = 8      # seq len of x1 (queries)
N2 = 8     # seq len of x2 (keys / values of the first attention)


def _attention(q, k, v, hm, bias):
    """All-heads / all-batches attention in two MXU pushes.

    q: (RQ, INNER) f32, rows ordered (batch, position).
    k, v: (NK_ALL, INNER) f32.
    hm:  (C, INNER) bf16, hm[c, f] = 1 iff head(c) == head(f)   (precomputed)
    bias:(RQ, C)   f32, 0 for same-batch columns, -1e30 otherwise (precomputed)

    Score columns are head-major: c = h*(B*Nk) + b'*Nk + j.  K/V are expanded
    to block-diagonal-by-head matrices with hm; the additive bias removes
    cross-batch columns BEFORE the row max (so no underflow of a whole block).
    The PV rhs is [v_bd | hm]: one matmul produces both the unnormalised
    output and the per-(row, head) softmax denominator, already broadcast to
    the 64 output lanes.  NOTE: relies on a per-row (not per-block) max
    stabiliser, valid because all scores within a row have similar magnitude.
    """
    bf16 = jnp.bfloat16
    f32 = jnp.float32
    reps = hm.shape[0] // k.shape[0]          # == HEADS

    kb = k.astype(bf16)
    vb = v.astype(bf16)
    k_bd = jnp.concatenate([kb] * reps, axis=0) * hm          # (C, INNER)
    v_bd = jnp.concatenate([vb] * reps, axis=0) * hm          # (C, INNER)

    # scores (softmax scale is already folded into Wq)
    s = lax.dot_general(q.astype(bf16), k_bd, (((1,), (1,)), ((), ())),
                        preferred_element_type=f32)           # (RQ, C)
    s = s + bias                                              # mask before max
    s = s - jnp.max(s, axis=-1, keepdims=True)
    e = jnp.exp(s)                                            # cross-batch -> 0.0

    # fused PV + denominator: rhs = [v_bd | hm], shape (C, 2*INNER) = (128,128)
    rhs = jnp.concatenate([v_bd, hm], axis=1)
    pv_den = jnp.dot(e.astype(bf16), rhs, preferred_element_type=f32)
    pv = pv_den[:, :INNER]
    den = pv_den[:, INNER:]                                   # head-expanded sums
    return pv / den                                           # exact reciprocal


def mcgf_kernel(xcat_ref, w_ref, bo_ref, hm_ref, bias_ref, out_ref):
    bf16 = jnp.bfloat16
    f32 = jnp.float32
    r = out_ref.shape[0]                 # rows of x1 (= B*N)

    xcat = xcat_ref[...]                 # (R + R2, DIM) f32: [x1 ; x2]
    w = w_ref[...]                       # (DIM, 4*INNER) bf16: [Wq*s|Wk|Wv|Wo^T]
    wqkv = w[:, :3 * INNER]
    wo_t = w[:, 3 * INNER:]              # (DIM, INNER) == Wo^T
    bo = bo_ref[...]                     # (1, DIM) f32
    hm = hm_ref[...]                     # (C, INNER) bf16
    bias = bias_ref[...]                 # (R, C) f32

    # fused QKV projection of x1 AND x2 in a single MXU push.
    p = jnp.dot(xcat.astype(bf16), wqkv, preferred_element_type=f32)
    p1 = p[:r]                           # (R,  3*INNER): x1's q | k | v
    p2 = p[r:]                           # (R2, 3*INNER): x2's q | k | v

    # ---- first cross-attention: q from x1, k/v from x2 ----
    a1 = _attention(p1[:, :INNER],
                    p2[:, INNER:2 * INNER],
                    p2[:, 2 * INNER:], hm, bias)              # (R, INNER)
    o1 = lax.dot_general(a1.astype(bf16), wo_t, (((1,), (1,)), ((), ())),
                         preferred_element_type=f32) + bo
    y = xcat[:r] + o1                                         # residual (f32)

    # ---- second attention: q/k from y (its V-projection is never used),
    #      v from x1 (already computed in p1) ----
    py = jnp.dot(y.astype(bf16), wqkv[:, :2 * INNER],
                 preferred_element_type=f32)                  # 128 cols: 1 push on v5e
    a2 = _attention(py[:, :INNER],
                    py[:, INNER:],
                    p1[:, 2 * INNER:], hm, bias)              # (R, INNER)
    o2 = lax.dot_general(a2.astype(bf16), wo_t, (((1,), (1,)), ((), ())),
                         preferred_element_type=f32) + bo

    out_ref[...] = o2.astype(out_ref.dtype)


def _build_masks(b, nq, nk):
    """Precompute (numpy) the head block-diag mask and additive batch bias."""
    nk_all = b * nk
    c = HEADS * nk_all
    col = np.arange(c)[:, None]
    feat = np.arange(INNER)[None, :]
    hm = (col // nk_all == feat // DIM_HEAD).astype(np.float32)        # (C, INNER)
    row = np.arange(b * nq)[:, None]
    colr = np.arange(c)[None, :]
    same_batch = (row // nq) == ((colr % nk_all) // nk)
    bias = np.where(same_batch, 0.0, -1e30).astype(np.float32)          # (RQ, C)
    return jnp.asarray(hm, dtype=jnp.bfloat16), jnp.asarray(bias, dtype=jnp.float32)


def mcgf_pallas(x1, x2, wq, wk, wv, wo, bo):
    b, n, dim = x1.shape
    b2, n2, _ = x2.shape
    assert b == b2 and dim == DIM
    # one shared mask pair serves both attentions only when n == n2;
    # for n != n2 pass a second (hm, bias) pair for attention 2.
    assert n == n2, "this Pallas path shares masks and requires n == n2"

    r, r2 = b * n, b * n2
    xcat = jnp.concatenate([x1.reshape(r, dim), x2.reshape(r2, dim)], axis=0)
    # packed bf16 weights: [Wq * scale | Wk | Wv | Wo^T]  -> one DMA, bf16 MXU.
    w_all = jnp.concatenate([wq * SCALE, wk, wv, wo.T], axis=1).astype(jnp.bfloat16)
    bo2d = bo.reshape(1, dim).astype(jnp.float32)
    hm, bias = _build_masks(b, n, n2)

    out = pl.pallas_call(
        mcgf_kernel,
        out_shape=jax.ShapeDtypeStruct((r, dim), jnp.float32),
        grid=(1,),                                    # single invocation (tiny problem)
        in_specs=[
            pl.BlockSpec((r + r2, dim), lambda i: (0, 0)),        # [x1 ; x2] flat
            pl.BlockSpec((dim, 4 * INNER), lambda i: (0, 0)),     # packed weights
            pl.BlockSpec((1, dim), lambda i: (0, 0)),             # out bias
            pl.BlockSpec(hm.shape, lambda i: (0, 0)),             # head mask
            pl.BlockSpec(bias.shape, lambda i: (0, 0)),           # batch bias
        ],
        out_specs=pl.BlockSpec((r, dim), lambda i: (0, 0)),
        compiler_params=pltpu.CompilerParams(
            dimension_semantics=("arbitrary",)),
    )(xcat, w_all, bo2d, hm, bias)
    return out.reshape(b, n, dim)                      # free metadata reshape


# ------------------------- pure-JAX reference ------------------------------
def mcgf_ref(x1, x2, wq, wk, wv, wo, bo):
    def split_heads(t):                       # (b, n, inner) -> (b, h, n, d)
        b_, n_, _ = t.shape
        return t.reshape(b_, n_, HEADS, DIM_HEAD).transpose(0, 2, 1, 3)

    def attn(qf, kf, vf):
        qh, kh, vh = split_heads(qf), split_heads(kf), split_heads(vf)
        dots = jnp.einsum('bhid,bhjd->bhij', qh, kh) * SCALE
        p = jax.nn.softmax(dots, axis=-1)
        o = jnp.einsum('bhij,bhjd->bhid', p, vh)
        b_, h_, n_, d_ = o.shape
        return o.transpose(0, 2, 1, 3).reshape(b_, n_, h_ * d_)

    q, k, v = x1 @ wq, x2 @ wk, x2 @ wv
    o1 = attn(q, k, v) @ wo + bo
    y = x1 + o1
    fq, fk, fv = y @ wq, y @ wk, x1 @ wv
    o2 = attn(fq, fk, fv) @ wo + bo
    return o2


if __name__ == "__main__":
    key = jax.random.PRNGKey(0)
    kx1, kx2, kq, kk, kv, ko, kb = jax.random.split(key, 7)

    x1 = jax.random.normal(kx1, (B, N, DIM), dtype=jnp.float32)
    x2 = jax.random.normal(kx2, (B, N2, DIM), dtype=jnp.float32)

    # deterministic parameter init (synthetic weights, Linear-layer shapes)
    wq = 0.05 * jax.random.normal(kq, (DIM, INNER), dtype=jnp.float32)
    wk = 0.05 * jax.random.normal(kk, (DIM, INNER), dtype=jnp.float32)
    wv = 0.05 * jax.random.normal(kv, (DIM, INNER), dtype=jnp.float32)
    wo = 0.05 * jax.random.normal(ko, (INNER, DIM), dtype=jnp.float32)
    bo = 0.05 * jax.random.normal(kb, (DIM,), dtype=jnp.float32)

    out = jax.block_until_ready(mcgf_pallas(x1, x2, wq, wk, wv, wo, bo))
    ref = mcgf_ref(x1, x2, wq, wk, wv, wo, bo)

    assert out.shape == (B, N, DIM)
    # tolerance 5e-3: MXU operands are cast to bf16 (per the perf review) while
    # accumulation, softmax, residual and normalisation stay float32 (exact
    # reciprocal restored); observed error is well inside this bound.
    err = float(jnp.max(jnp.abs(out - ref)))
    assert err < 5e-3, f"mismatch vs reference: {err}"

    print("KERNEL_OK")
</pallas_src>

<mosaic_0001>
module attributes {stable_mosaic.version = 11 : i64} {
  func.func @mcgf_kernel(%arg0: i32, %arg1: memref<32x32xf32, #tpu.memory_space<vmem>>, %arg2: memref<32x256xbf16, #tpu.memory_space<vmem>>, %arg3: memref<1x32xf32, #tpu.memory_space<vmem>>, %arg4: memref<128x64xbf16, #tpu.memory_space<vmem>>, %arg5: memref<16x128xf32, #tpu.memory_space<vmem>>, %arg6: memref<16x32xf32, #tpu.memory_space<vmem>>) attributes {dimension_semantics = [#tpu.dimension_semantics<arbitrary>], iteration_bounds = array<i64: 1>, scalar_prefetch = 0 : i64, scratch_operands = 0 : i64, tpu.core_type = #tpu.core_type<tc>, window_params = [{pipeline_mode = #tpu.pipeline_mode<synchronous>, transform_indices = @transform_0, window_bounds = array<i64: 32, 32>}, {pipeline_mode = #tpu.pipeline_mode<synchronous>, transform_indices = @transform_1, window_bounds = array<i64: 32, 256>}, {pipeline_mode = #tpu.pipeline_mode<synchronous>, transform_indices = @transform_2, window_bounds = array<i64: 1, 32>}, {pipeline_mode = #tpu.pipeline_mode<synchronous>, transform_indices = @transform_3, window_bounds = array<i64: 128, 64>}, {pipeline_mode = #tpu.pipeline_mode<synchronous>, transform_indices = @transform_4, window_bounds = array<i64: 16, 128>}, {pipeline_mode = #tpu.pipeline_mode<synchronous>, transform_indices = @transform_5, window_bounds = array<i64: 16, 32>}]} {
    %c0 = arith.constant 0 : index
    %c0_0 = arith.constant 0 : index
    %0 = vector.load %arg1[%c0, %c0_0] : memref<32x32xf32, #tpu.memory_space<vmem>>, vector<32x32xf32>
    %c0_1 = arith.constant 0 : index
    %c0_2 = arith.constant 0 : index
    %1 = vector.load %arg2[%c0_1, %c0_2] : memref<32x256xbf16, #tpu.memory_space<vmem>>, vector<32x256xbf16>
    %2 = vector.extract_strided_slice %1 {offsets = [0, 0], sizes = [32, 192], strides = [1, 1]} : vector<32x256xbf16> to vector<32x192xbf16>
    %3 = vector.extract_strided_slice %1 {offsets = [0, 192], sizes = [32, 64], strides = [1, 1]} : vector<32x256xbf16> to vector<32x64xbf16>
    %c0_3 = arith.constant 0 : index
    %c0_4 = arith.constant 0 : index
    %4 = vector.load %arg3[%c0_3, %c0_4] : memref<1x32xf32, #tpu.memory_space<vmem>>, vector<1x32xf32>
    %c0_5 = arith.constant 0 : index
    %c0_6 = arith.constant 0 : index
    %5 = vector.load %arg4[%c0_5, %c0_6] : memref<128x64xbf16, #tpu.memory_space<vmem>>, vector<128x64xbf16>
    %c0_7 = arith.constant 0 : index
    %c0_8 = arith.constant 0 : index
    %6 = vector.load %arg5[%c0_7, %c0_8] : memref<16x128xf32, #tpu.memory_space<vmem>>, vector<16x128xf32>
    %7 = arith.truncf %0 : vector<32x32xf32> to vector<32x32xbf16>
    %cst = arith.constant dense<0.000000e+00> : vector<32x192xf32>
    %8 = tpu.matmul %7, %2, %cst {dimension_numbers = #tpu.dot_dimension_numbers<[1], [0], [0], [1], [0, 0, 1, 1], [], []>} : vector<32x32xbf16>, vector<32x192xbf16>, vector<32x192xf32> -> vector<32x192xf32>
    %9 = vector.extract_strided_slice %8 {offsets = [0, 0], sizes = [16, 192], strides = [1, 1]} : vector<32x192xf32> to vector<16x192xf32>
    %10 = vector.extract_strided_slice %8 {offsets = [16, 0], sizes = [16, 192], strides = [1, 1]} : vector<32x192xf32> to vector<16x192xf32>
    %11 = vector.extract_strided_slice %9 {offsets = [0, 0], sizes = [16, 64], strides = [1, 1]} : vector<16x192xf32> to vector<16x64xf32>
    %12 = vector.extract_strided_slice %10 {offsets = [0, 64], sizes = [16, 64], strides = [1, 1]} : vector<16x192xf32> to vector<16x64xf32>
    %13 = vector.extract_strided_slice %10 {offsets = [0, 128], sizes = [16, 64], strides = [1, 1]} : vector<16x192xf32> to vector<16x64xf32>
    %14 = arith.truncf %12 : vector<16x64xf32> to vector<16x64xbf16>
    %15 = arith.truncf %13 : vector<16x64xf32> to vector<16x64xbf16>
    %16 = tpu.concatenate %14, %14, %14, %14, %14, %14, %14, %14 in 0 : vector<16x64xbf16>, vector<16x64xbf16>, vector<16x64xbf16>, vector<16x64xbf16>, vector<16x64xbf16>, vector<16x64xbf16>, vector<16x64xbf16>, vector<16x64xbf16> -> vector<128x64xbf16>
    %17 = arith.mulf %16, %5 : vector<128x64xbf16>
    %18 = tpu.concatenate %15, %15, %15, %15, %15, %15, %15, %15 in 0 : vector<16x64xbf16>, vector<16x64xbf16>, vector<16x64xbf16>, vector<16x64xbf16>, vector<16x64xbf16>, vector<16x64xbf16>, vector<16x64xbf16>, vector<16x64xbf16> -> vector<128x64xbf16>
    %19 = arith.mulf %18, %5 : vector<128x64xbf16>
    %20 = arith.truncf %11 : vector<16x64xf32> to vector<16x64xbf16>
    %cst_9 = arith.constant dense<0.000000e+00> : vector<16x128xf32>
    %21 = tpu.matmul %20, %17, %cst_9 {dimension_numbers = #tpu.dot_dimension_numbers<[1], [1], [0], [0], [0, 0, 1, 0], [], []>} : vector<16x64xbf16>, vector<128x64xbf16>, vector<16x128xf32> -> vector<16x128xf32>
    %22 = arith.addf %21, %6 : vector<16x128xf32>
    %cst_10 = arith.constant dense<0xFF800000> : vector<16xf32>
    %23 = vector.multi_reduction <maximumf>, %22, %cst_10 [1] : vector<16x128xf32> to vector<16xf32>
    %24 = vector.shape_cast %23 : vector<16xf32> to vector<16x1xf32>
    %25 = vector.broadcast %24 : vector<16x1xf32> to vector<16x128xf32>
    %26 = arith.subf %22, %25 : vector<16x128xf32>
    %27 = math.exp %26 : vector<16x128xf32>
    %28 = tpu.concatenate %19, %5 in 1 : vector<128x64xbf16>, vector<128x64xbf16> -> vector<128x128xbf16>
    %29 = arith.truncf %27 : vector<16x128xf32> to vector<16x128xbf16>
    %cst_11 = arith.constant dense<0.000000e+00> : vector<16x128xf32>
    %30 = tpu.matmul %29, %28, %cst_11 {dimension_numbers = #tpu.dot_dimension_numbers<[1], [0], [0], [1], [0, 0, 1, 1], [], []>} : vector<16x128xbf16>, vector<128x128xbf16>, vector<16x128xf32> -> vector<16x128xf32>
    %31 = vector.extract_strided_slice %30 {offsets = [0, 0], sizes = [16, 64], strides = [1, 1]} : vector<16x128xf32> to vector<16x64xf32>
    %32 = vector.extract_strided_slice %30 {offsets = [0, 64], sizes = [16, 64], strides = [1, 1]} : vector<16x128xf32> to vector<16x64xf32>
    %33 = arith.divf %31, %32 : vector<16x64xf32>
    %34 = arith.truncf %33 : vector<16x64xf32> to vector<16x64xbf16>
    %cst_12 = arith.constant dense<0.000000e+00> : vector<16x32xf32>
    %35 = tpu.matmul %34, %3, %cst_12 {dimension_numbers = #tpu.dot_dimension_numbers<[1], [1], [0], [0], [0, 0, 1, 0], [], []>} : vector<16x64xbf16>, vector<32x64xbf16>, vector<16x32xf32> -> vector<16x32xf32>
    %36 = vector.broadcast %4 : vector<1x32xf32> to vector<16x32xf32>
    %37 = arith.addf %35, %36 : vector<16x32xf32>
    %38 = vector.extract_strided_slice %0 {offsets = [0, 0], sizes = [16, 32], strides = [1, 1]} : vector<32x32xf32> to vector<16x32xf32>
    %39 = arith.addf %38, %37 : vector<16x32xf32>
    %40 = arith.truncf %39 : vector<16x32xf32> to vector<16x32xbf16>
    %41 = vector.extract_strided_slice %2 {offsets = [0, 0], sizes = [32, 128], strides = [1, 1]} : vector<32x192xbf16> to vector<32x128xbf16>
    %cst_13 = arith.constant dense<0.000000e+00> : vector<16x128xf32>
    %42 = tpu.matmul %40, %41, %cst_13 {dimension_numbers = #tpu.dot_dimension_numbers<[1], [0], [0], [1], [0, 0, 1, 1], [], []>} : vector<16x32xbf16>, vector<32x128xbf16>, vector<16x128xf32> -> vector<16x128xf32>
    %43 = vector.extract_strided_slice %42 {offsets = [0, 0], sizes = [16, 64], strides = [1, 1]} : vector<16x128xf32> to vector<16x64xf32>
    %44 = vector.extract_strided_slice %42 {offsets = [0, 64], sizes = [16, 64], strides = [1, 1]} : vector<16x128xf32> to vector<16x64xf32>
    %45 = vector.extract_strided_slice %9 {offsets = [0, 128], sizes = [16, 64], strides = [1, 1]} : vector<16x192xf32> to vector<16x64xf32>
    %46 = arith.truncf %44 : vector<16x64xf32> to vector<16x64xbf16>
    %47 = arith.truncf %45 : vector<16x64xf32> to vector<16x64xbf16>
    %48 = tpu.concatenate %46, %46, %46, %46, %46, %46, %46, %46 in 0 : vector<16x64xbf16>, vector<16x64xbf16>, vector<16x64xbf16>, vector<16x64xbf16>, vector<16x64xbf16>, vector<16x64xbf16>, vector<16x64xbf16>, vector<16x64xbf16> -> vector<128x64xbf16>
    %49 = arith.mulf %48, %5 : vector<128x64xbf16>
    %50 = tpu.concatenate %47, %47, %47, %47, %47, %47, %47, %47 in 0 : vector<16x64xbf16>, vector<16x64xbf16>, vector<16x64xbf16>, vector<16x64xbf16>, vector<16x64xbf16>, vector<16x64xbf16>, vector<16x64xbf16>, vector<16x64xbf16> -> vector<128x64xbf16>
    %51 = arith.mulf %50, %5 : vector<128x64xbf16>
    %52 = arith.truncf %43 : vector<16x64xf32> to vector<16x64xbf16>
    %cst_14 = arith.constant dense<0.000000e+00> : vector<16x128xf32>
    %53 = tpu.matmul %52, %49, %cst_14 {dimension_numbers = #tpu.dot_dimension_numbers<[1], [1], [0], [0], [0, 0, 1, 0], [], []>} : vector<16x64xbf16>, vector<128x64xbf16>, vector<16x128xf32> -> vector<16x128xf32>
    %54 = arith.addf %53, %6 : vector<16x128xf32>
    %cst_15 = arith.constant dense<0xFF800000> : vector<16xf32>
    %55 = vector.multi_reduction <maximumf>, %54, %cst_15 [1] : vector<16x128xf32> to vector<16xf32>
    %56 = vector.shape_cast %55 : vector<16xf32> to vector<16x1xf32>
    %57 = vector.broadcast %56 : vector<16x1xf32> to vector<16x128xf32>
    %58 = arith.subf %54, %57 : vector<16x128xf32>
    %59 = math.exp %58 : vector<16x128xf32>
    %60 = tpu.concatenate %51, %5 in 1 : vector<128x64xbf16>, vector<128x64xbf16> -> vector<128x128xbf16>
    %61 = arith.truncf %59 : vector<16x128xf32> to vector<16x128xbf16>
    %cst_16 = arith.constant dense<0.000000e+00> : vector<16x128xf32>
    %62 = tpu.matmul %61, %60, %cst_16 {dimension_numbers = #tpu.dot_dimension_numbers<[1], [0], [0], [1], [0, 0, 1, 1], [], []>} : vector<16x128xbf16>, vector<128x128xbf16>, vector<16x128xf32> -> vector<16x128xf32>
    %63 = vector.extract_strided_slice %62 {offsets = [0, 0], sizes = [16, 64], strides = [1, 1]} : vector<16x128xf32> to vector<16x64xf32>
    %64 = vector.extract_strided_slice %62 {offsets = [0, 64], sizes = [16, 64], strides = [1, 1]} : vector<16x128xf32> to vector<16x64xf32>
    %65 = arith.divf %63, %64 : vector<16x64xf32>
    %66 = arith.truncf %65 : vector<16x64xf32> to vector<16x64xbf16>
    %cst_17 = arith.constant dense<0.000000e+00> : vector<16x32xf32>
    %67 = tpu.matmul %66, %3, %cst_17 {dimension_numbers = #tpu.dot_dimension_numbers<[1], [1], [0], [0], [0, 0, 1, 0], [], []>} : vector<16x64xbf16>, vector<32x64xbf16>, vector<16x32xf32> -> vector<16x32xf32>
    %68 = vector.broadcast %4 : vector<1x32xf32> to vector<16x32xf32>
    %69 = arith.addf %67, %68 : vector<16x32xf32>
    %c0_18 = arith.constant 0 : index
    %c0_19 = arith.constant 0 : index
    %70 = vector.load %arg6[%c0_18, %c0_19] : memref<16x32xf32, #tpu.memory_space<vmem>>, vector<16x32xf32>
    tpu.vector_store %arg6[%c0_18, %c0_19], %69 {strides = array<i32>} : memref<16x32xf32, #tpu.memory_space<vmem>>, vector<16x32xf32>,
    return
  }
  func.func @transform_0(%arg0: i32) -> (i32, i32) {
    %c0_i32 = arith.constant 0 : i32
    %c0_i32_0 = arith.constant 0 : i32
    %c0_i32_1 = arith.constant 0 : i32
    return %c0_i32, %c0_i32_0 : i32, i32
  }
  func.func @transform_1(%arg0: i32) -> (i32, i32) {
    %c0_i32 = arith.constant 0 : i32
    %c0_i32_0 = arith.constant 0 : i32
    %c0_i32_1 = arith.constant 0 : i32
    return %c0_i32, %c0_i32_0 : i32, i32
  }
  func.func @transform_2(%arg0: i32) -> (i32, i32) {
    %c0_i32 = arith.constant 0 : i32
    %c0_i32_0 = arith.constant 0 : i32
    %c0_i32_1 = arith.constant 0 : i32
    return %c0_i32, %c0_i32_0 : i32, i32
  }
  func.func @transform_3(%arg0: i32) -> (i32, i32) {
    %c0_i32 = arith.constant 0 : i32
    %c0_i32_0 = arith.constant 0 : i32
    %c0_i32_1 = arith.constant 0 : i32
    return %c0_i32, %c0_i32_0 : i32, i32
  }
  func.func @transform_4(%arg0: i32) -> (i32, i32) {
    %c0_i32 = arith.constant 0 : i32
    %c0_i32_0 = arith.constant 0 : i32
    %c0_i32_1 = arith.constant 0 : i32
    return %c0_i32, %c0_i32_0 : i32, i32
  }
  func.func @transform_5(%arg0: i32) -> (i32, i32) {
    %c0_i32 = arith.constant 0 : i32
    %c0_i32_0 = arith.constant 0 : i32
    %c0_i32_1 = arith.constant 0 : i32
    return %c0_i32, %c0_i32_0 : i32, i32
  }
}

</mosaic_0001>

<llo_original>
// kernel: tpu_custom_call.1
$region0: #{tpu_custom_call.1}
  #allocation0 [shape = 'u32[]', space=smem, size = 0x4, offset = 0x4, fixed_abs, tag = 'smem constant byte address 0x4 - core index']
  #allocation1 [shape = 'u32[72,128]{1,0:T(1,128)}', space=vmem, size = 0x9000, scoped, tag = 'internal scratch']
  %s0 = inlined_call_operand.vmem [shape: f32[32,32], index: 0, kind: input, shape index: {}]
  %s1 = inlined_call_operand.vmem [shape: bf16[32,256], index: 1, kind: input, shape index: {}]
  %s2 = inlined_call_operand.vmem [shape: f32[1,32], index: 2, kind: input, shape index: {}]
  %s3 = inlined_call_operand.vmem [shape: bf16[128,64], index: 3, kind: input, shape index: {}]
  %s4 = inlined_call_operand.vmem [shape: f32[16,128], index: 4, kind: input, shape index: {}]
  %s5 = inlined_call_operand.hbm [shape: f32[16,32], index: 5, kind: output, shape index: {}]
  %s6 = sld [smem:[#allocation0]]
  $region30: #{tpu_custom_call.1} parent=0
    _
  %s8 = ssub.s32 1, %s6
  %s9 = scalar_select 0, %s8, %s6
  $region1: #{tpu_custom_call.1} parent=0
    #allocation2 [shape = 'u8[8192]{0}', space=vmem, size = 0x2000, scoped, tag = 'output window, operand 0, single buffered']
    #allocation3 [shape = 's32[1]{0}', space=sflag, size = 0x4, scoped, tag = 'scoped memory for tpu_custom_call.1']
    %10 = vsyncpa [#allocation3], 0
    // Predicated region
    $region2: #{tpu_custom_call.1} parent=1 // pred_check
      _
    $region3: #{tpu_custom_call.1} parent=1 // pred_check_branch
      %12 = sbr.rel (0) target = $region5
    $region4: #{tpu_custom_call.1} parent=1 // pred_region
      _
    $region5: #{tpu_custom_call.1} parent=1 // pred_fallthru
      _
    // Predicated region
    $region6: #{tpu_custom_call.1} parent=1 // pred_check
      _
    $region7: #{tpu_custom_call.1} parent=1 // pred_check_branch
      %14 = sbr.rel (0) target = $region9
    $region8: #{tpu_custom_call.1} parent=1 // pred_region
      _
    $region9: #{tpu_custom_call.1} parent=1 // pred_fallthru
      _
    // Predicated region
    $region10: #{tpu_custom_call.1} parent=1 // pred_check
      _
    $region11: #{tpu_custom_call.1} parent=1 // pred_check_branch
      %16 = sbr.rel (0) target = $region13
    $region12: #{tpu_custom_call.1} parent=1 // pred_region
      _
    $region13: #{tpu_custom_call.1} parent=1 // pred_fallthru
      _
    // Predicated region
    $region14: #{tpu_custom_call.1} parent=1 // pred_check
      _
    $region15: #{tpu_custom_call.1} parent=1 // pred_check_branch
      %18 = sbr.rel (0) target = $region17
    $region16: #{tpu_custom_call.1} parent=1 // pred_region
      _
    $region17: #{tpu_custom_call.1} parent=1 // pred_fallthru
      _
    // Predicated region
    $region18: #{tpu_custom_call.1} parent=1 // pred_check
      _
    $region19: #{tpu_custom_call.1} parent=1 // pred_check_branch
      %20 = sbr.rel (0) target = $region21
    $region20: #{tpu_custom_call.1} parent=1 // pred_region
      _
    $region21: #{tpu_custom_call.1} parent=1 // pred_fallthru
      _
    %v22 = vld [vmem:[%s0] sm:$0xff]
    %v23 = vld [vmem:[%s0 + $0x8] sm:$0xff]
    %v24 = vld [vmem:[%s0 + $0x10] sm:$0xff]
    %v25 = vld [vmem:[%s0 + $0x18] sm:$0xff]
    %v26 = vld [vmem:[%s1] sm:$0xff]
    %v27 = vld [vmem:[%s1 + $0x8] sm:$0xff]
    %v28 = vld [vmem:[%s1 + $0x10] sm:$0xff]
    %v29 = vld [vmem:[%s1 + $0x18] sm:$0xff]
    %v30 = vld [vmem:[%s2] sm:$0x1]
    %v31 = vld [vmem:[%s3] sm:$0xf]
    %v32 = vld [vmem:[%s3 + $0x4] sm:$0xf]
    %v33 = vld [vmem:[%s3 + $0x8] sm:$0xf]
    %v34 = vld [vmem:[%s3 + $0xc] sm:$0xf]
    %v35 = vld [vmem:[%s3 + $0x10] sm:$0xf]
    %v36 = vld [vmem:[%s3 + $0x14] sm:$0xf]
    %v37 = vld [vmem:[%s3 + $0x18] sm:$0xf]
    %v38 = vld [vmem:[%s3 + $0x1c] sm:$0xf]
    %v39 = vld [vmem:[%s3 + $0x20] sm:$0xf]
    %v40 = vld [vmem:[%s3 + $0x24] sm:$0xf]
    %v41 = vld [vmem:[%s3 + $0x28] sm:$0xf]
    %v42 = vld [vmem:[%s3 + $0x2c] sm:$0xf]
    %v43 = vld [vmem:[%s3 + $0x30] sm:$0xf]
    %v44 = vld [vmem:[%s3 + $0x34] sm:$0xf]
    %v45 = vld [vmem:[%s3 + $0x38] sm:$0xf]
    %v46 = vld [vmem:[%s3 + $0x3c] sm:$0xf]
    %v47 = vld [vmem:[%s4] sm:$0xff]
    %v48 = vld [vmem:[%s4 + $0x8] sm:$0xff]
    %v49 = vpack.c.bf16 %v23, %v22
    %v50 = vpack.c.bf16 %v25, %v24
    %v55 = vunpack.c.l.b16 %v26
    %v56 = vunpack.c.h.b16 %v26
    %v57 = vunpack.c.l.b16 %v27
    %v58 = vunpack.c.h.b16 %v27
    %v59 = vunpack.c.l.b16 %v28
    %v60 = vunpack.c.h.b16 %v28
    %v61 = vunpack.c.l.b16 %v29
    %v62 = vunpack.c.h.b16 %v29
    %v63 = vpack.c.b16 %v57, %v55
    %v64 = vpack.c.b16 %v58, %v56
    %v65 = vpack.c.b16 %v61, %v59
    %v66 = vpack.c.b16 %v62, %v60
    %vm71 = vcmask 261120
    %v73 = vsel %vm71, %v49, 0
    %v76 = vsel %vm71, %v50, 0
    %78 = vmatpush.bf16.msra.mxu0 0
    %79 = vmatpush.bf16.msra.mxu0 0
    %80 = vmatpush.bf16.msra.mxu0 0
    %81 = vmatpush.bf16.msra.mxu0 0
    %82 = vmatpush.bf16.msra.mxu0 0
    %83 = vmatpush.bf16.msra.mxu0 0
    %84 = vmatpush.bf16.msra.mxu0 %v65
    %85 = vmatpush.bf16.msra.mxu0 %v63
    %86 = vmatmul.bf16.gmra.mxu0 %v73
    %v87 = vpop.f32.mrf.mxu0
    %v88 = vadd.f32 0.0, %v87
    %v89 = vpop.f32.mrf.mxu0
    %v90 = vadd.f32 0.0, %v89
    %91 = vmatmul.bf16.gmra.mxu0 %v76
    %v92 = vpop.f32.mrf.mxu0
    %v93 = vadd.f32 0.0, %v92
    %v94 = vpop.f32.mrf.mxu0
    %v95 = vadd.f32 0.0, %v94
    %96 = vdwg.mxu0
    %97 = vmatpush.bf16.msra.mxu0 0
    %98 = vmatpush.bf16.msra.mxu0 0
    %99 = vmatpush.bf16.msra.mxu0 0
    %100 = vmatpush.bf16.msra.mxu0 0
    %101 = vmatpush.bf16.msra.mxu0 0
    %102 = vmatpush.bf16.msra.mxu0 0
    %103 = vmatpush.bf16.msra.mxu0 %v66
    %104 = vmatpush.bf16.msra.mxu0 %v64
    %105 = vmatmul.bf16.gmra.mxu0 %v73
    %v106 = vpop.f32.mrf.mxu0
    %v107 = vadd.f32 0.0, %v106
    %v108 = vpop.f32.mrf.mxu0
    %v109 = vadd.f32 0.0, %v108
    %110 = vmatmul.bf16.gmra.mxu0 %v76
    %v111 = vpop.f32.mrf.mxu0
    %v112 = vadd.f32 0.0, %v111
    %v113 = vpop.f32.mrf.mxu0
    %v114 = vadd.f32 0.0, %v113
    %115 = vdwg.mxu0
    %v116 = vpack.c.bf16 %v93, %v93
    %v117 = vpack.c.bf16 %v95, %v95
    %v118 = vpack.c.bf16 %v112, %v112
    %v119 = vpack.c.bf16 %v114, %v114
    %v122 = vunpack.c.l.b16 %v116
    %v123 = vunpack.c.l.b16 %v117
    %v124 = vpack.c.b16 %v123, %v122
    %v126 = vunpack.c.l.bf16 %v124
    %v127 = vunpack.c.h.bf16 %v124
    %v128 = vunpack.c.l.bf16 %v31
    %v129 = vunpack.c.l.bf16 %v32
    %v130 = vunpack.c.l.bf16 %v33
    %v131 = vunpack.c.l.bf16 %v34
    %v132 = vunpack.c.l.bf16 %v35
    %v133 = vunpack.c.l.bf16 %v36
    %v134 = vunpack.c.l.bf16 %v37
    %v135 = vunpack.c.l.bf16 %v38
    %v136 = vunpack.c.l.bf16 %v39
    %v137 = vunpack.c.l.bf16 %v40
    %v138 = vunpack.c.l.bf16 %v41
    %v139 = vunpack.c.l.bf16 %v42
    %v140 = vunpack.c.l.bf16 %v43
    %v141 = vunpack.c.l.bf16 %v44
    %v142 = vunpack.c.l.bf16 %v45
    %v143 = vunpack.c.l.bf16 %v46
    %160 = vrot.lane.b32.xlu0 %v128, 64
    %v161 = vpop.permute.xlu0 %160
    %162 = vrot.lane.b32.xlu0 %v129, 64
    %v163 = vpop.permute.xlu0 %162
    %164 = vrot.lane.b32.xlu0 %v130, 64
    %v165 = vpop.permute.xlu0 %164
    %166 = vrot.lane.b32.xlu0 %v131, 64
    %v167 = vpop.permute.xlu0 %166
    %168 = vrot.lane.b32.xlu0 %v132, 64
    %v169 = vpop.permute.xlu0 %168
    %170 = vrot.lane.b32.xlu0 %v133, 64
    %v171 = vpop.permute.xlu0 %170
    %172 = vrot.lane.b32.xlu0 %v134, 64
    %v173 = vpop.permute.xlu0 %172
    %174 = vrot.lane.b32.xlu0 %v135, 64
    %v175 = vpop.permute.xlu0 %174
    %176 = vrot.lane.b32.xlu0 %v136, 64
    %v177 = vpop.permute.xlu0 %176
    %178 = vrot.lane.b32.xlu0 %v137, 64
    %v179 = vpop.permute.xlu0 %178
    %180 = vrot.lane.b32.xlu0 %v138, 64
    %v181 = vpop.permute.xlu0 %180
    %182 = vrot.lane.b32.xlu0 %v139, 64
    %v183 = vpop.permute.xlu0 %182
    %184 = vrot.lane.b32.xlu0 %v140, 64
    %v185 = vpop.permute.xlu0 %184
    %186 = vrot.lane.b32.xlu0 %v141, 64
    %v187 = vpop.permute.xlu0 %186
    %188 = vrot.lane.b32.xlu0 %v142, 64
    %v189 = vpop.permute.xlu0 %188
    %190 = vrot.lane.b32.xlu0 %v143, 64
    %v191 = vpop.permute.xlu0 %190
    %v208 = vmul.f32 %v126, %v161
    %v209 = vmul.f32 %v127, %v163
    %v210 = vmul.f32 %v126, %v165
    %v211 = vmul.f32 %v127, %v167
    %v212 = vmul.f32 %v126, %v169
    %v213 = vmul.f32 %v127, %v171
    %v214 = vmul.f32 %v126, %v173
    %v215 = vmul.f32 %v127, %v175
    %v216 = vmul.f32 %v126, %v177
    %v217 = vmul.f32 %v127, %v179
    %v218 = vmul.f32 %v126, %v181
    %v219 = vmul.f32 %v127, %v183
    %v220 = vmul.f32 %v126, %v185
    %v221 = vmul.f32 %v127, %v187
    %v222 = vmul.f32 %v126, %v189
    %v223 = vmul.f32 %v127, %v191
    %v224 = vpack.c.bf16 %v209, %v208
    %v225 = vpack.c.bf16 %v211, %v210
    %v226 = vpack.c.bf16 %v213, %v212
    %v227 = vpack.c.bf16 %v215, %v214
    %v228 = vpack.c.bf16 %v217, %v216
    %v229 = vpack.c.bf16 %v219, %v218
    %v230 = vpack.c.bf16 %v221, %v220
    %v231 = vpack.c.bf16 %v223, %v222
    %v234 = vunpack.c.l.b16 %v118
    %v235 = vunpack.c.l.b16 %v119
    %v236 = vpack.c.b16 %v235, %v234
    %v238 = vunpack.c.l.bf16 %v236
    %v239 = vunpack.c.h.bf16 %v236
    %v240 = vmul.f32 %v238, %v128
    %v241 = vmul.f32 %v239, %v129
    %v242 = vmul.f32 %v238, %v130
    %v243 = vmul.f32 %v239, %v131
    %v244 = vmul.f32 %v238, %v132
    %v245 = vmul.f32 %v239, %v133
    %v246 = vmul.f32 %v238, %v134
    %v247 = vmul.f32 %v239, %v135
    %v248 = vmul.f32 %v238, %v136
    %v249 = vmul.f32 %v239, %v137
    %v250 = vmul.f32 %v238, %v138
    %v251 = vmul.f32 %v239, %v139
    %v252 = vmul.f32 %v238, %v140
    %v253 = vmul.f32 %v239, %v141
    %v254 = vmul.f32 %v238, %v142
    %v255 = vmul.f32 %v239, %v143
    %v256 = vpack.c.bf16 %v240, %v240
    %v257 = vpack.c.bf16 %v241, %v241
    %v258 = vpack.c.bf16 %v242, %v242
    %v259 = vpack.c.bf16 %v243, %v243
    %v260 = vpack.c.bf16 %v244, %v244
    %v261 = vpack.c.bf16 %v245, %v245
    %v262 = vpack.c.bf16 %v246, %v246
    %v263 = vpack.c.bf16 %v247, %v247
    %v264 = vpack.c.bf16 %v248, %v248
    %v265 = vpack.c.bf16 %v249, %v249
    %v266 = vpack.c.bf16 %v250, %v250
    %v267 = vpack.c.bf16 %v251, %v251
    %v268 = vpack.c.bf16 %v252, %v252
    %v269 = vpack.c.bf16 %v253, %v253
    %v270 = vpack.c.bf16 %v254, %v254
    %v271 = vpack.c.bf16 %v255, %v255
    %v272 = vpack.c.bf16 %v90, %v88
    %281 = vrot.lane.b32.xlu0 %v224, 64
    %v282 = vpop.permute.xlu0 %281
    %283 = vrot.lane.b32.xlu0 %v225, 64
    %v284 = vpop.permute.xlu0 %283
    %285 = vrot.lane.b32.xlu0 %v226, 64
    %v286 = vpop.permute.xlu0 %285
    %287 = vrot.lane.b32.xlu0 %v227, 64
    %v288 = vpop.permute.xlu0 %287
    %289 = vrot.lane.b32.xlu0 %v228, 64
    %v290 = vpop.permute.xlu0 %289
    %291 = vrot.lane.b32.xlu0 %v229, 64
    %v292 = vpop.permute.xlu0 %291
    %293 = vrot.lane.b32.xlu0 %v230, 64
    %v294 = vpop.permute.xlu0 %293
    %295 = vrot.lane.b32.xlu0 %v231, 64
    %v296 = vpop.permute.xlu0 %295
    %vm297 = vcmask 523264
    %v299 = vsel %vm297, %v272, 0
    %v302 = vsel %vm297, %v282, 0
    %v305 = vsel %vm297, %v284, 0
    %v308 = vsel %vm297, %v286, 0
    %v311 = vsel %vm297, %v288, 0
    %v314 = vsel %vm297, %v290, 0
    %v317 = vsel %vm297, %v292, 0
    %v320 = vsel %vm297, %v294, 0
    %v323 = vsel %vm297, %v296, 0
    %325 = vmatpush.bf16.xpose.msra.mxu0 %v323
    %326 = vmatpush.bf16.xpose.msra.mxu0 %v320
    %327 = vmatpush.bf16.xpose.msra.mxu0 %v317
    %328 = vmatpush.bf16.xpose.msra.mxu0 %v314
    %329 = vmatpush.bf16.xpose.msra.mxu0 %v311
    %330 = vmatpush.bf16.xpose.msra.mxu0 %v308
    %331 = vmatpush.bf16.xpose.msra.mxu0 %v305
    %332 = vmatpush.bf16.xpose.msra.mxu0 %v302
    %333 = vmatmul.bf16.gmra.mxu0 %v299
    %v334 = vpop.f32.mrf.mxu0
    %v335 = vadd.f32 %v47, %v334
    %v336 = vpop.f32.mrf.mxu0
    %v337 = vadd.f32 %v48, %v336
    %338 = vdwg.mxu0
    %339 = vmax.xlane.f32.xlu0 %v335
    %v340 = vpop.xlane.xlu0 %339
    %341 = vmax.xlane.f32.xlu0 %v337
    %v342 = vpop.xlane.xlu0 %341
    %v343 = vsub.f32 %v335, %v340
    %v344 = vsub.f32 %v337, %v342
    %v345 = vmul.f32 %v343, 1.442695
    %v346 = vpow.pop %v345
    %v347 = vmul.f32 %v344, 1.442695
    %v348 = vpow.pop %v347
    %v365 = vunpack.c.l.b16 %v256
    %v366 = vunpack.c.l.b16 %v257
    %v367 = vunpack.c.l.b16 %v258
    %v368 = vunpack.c.l.b16 %v259
    %v369 = vunpack.c.l.b16 %v260
    %v370 = vunpack.c.l.b16 %v261
    %v371 = vunpack.c.l.b16 %v262
    %v372 = vunpack.c.l.b16 %v263
    %v373 = vunpack.c.l.b16 %v264
    %v374 = vunpack.c.l.b16 %v265
    %v375 = vunpack.c.l.b16 %v266
    %v376 = vunpack.c.l.b16 %v267
    %v377 = vunpack.c.l.b16 %v268
    %v378 = vunpack.c.l.b16 %v269
    %v379 = vunpack.c.l.b16 %v270
    %v380 = vunpack.c.l.b16 %v271
    %v381 = vpack.c.b16 %v366, %v365
    %v382 = vpack.c.b16 %v368, %v367
    %v383 = vpack.c.b16 %v370, %v369
    %v384 = vpack.c.b16 %v372, %v371
    %v385 = vpack.c.b16 %v374, %v373
    %v386 = vpack.c.b16 %v376, %v375
    %v387 = vpack.c.b16 %v378, %v377
    %v388 = vpack.c.b16 %v380, %v379
    %v405 = vunpack.c.l.b16 %v31
    %v406 = vunpack.c.l.b16 %v32
    %v407 = vunpack.c.l.b16 %v33
    %v408 = vunpack.c.l.b16 %v34
    %v409 = vunpack.c.l.b16 %v35
    %v410 = vunpack.c.l.b16 %v36
    %v411 = vunpack.c.l.b16 %v37
    %v412 = vunpack.c.l.b16 %v38
    %v413 = vunpack.c.l.b16 %v39
    %v414 = vunpack.c.l.b16 %v40
    %v415 = vunpack.c.l.b16 %v41
    %v416 = vunpack.c.l.b16 %v42
    %v417 = vunpack.c.l.b16 %v43
    %v418 = vunpack.c.l.b16 %v44
    %v419 = vunpack.c.l.b16 %v45
    %v420 = vunpack.c.l.b16 %v46
    %v421 = vpack.c.b16 %v406, %v405
    %v422 = vpack.c.b16 %v408, %v407
    %v423 = vpack.c.b16 %v410, %v409
    %v424 = vpack.c.b16 %v412, %v411
    %v425 = vpack.c.b16 %v414, %v413
    %v426 = vpack.c.b16 %v416, %v415
    %v427 = vpack.c.b16 %v418, %v417
    %v428 = vpack.c.b16 %v420, %v419
    %429 = vrot.lane.b32.xlu0 %v421, 64
    %v430 = vpop.permute.xlu0 %429
    %431 = vrot.lane.b32.xlu0 %v422, 64
    %v432 = vpop.permute.xlu0 %431
    %433 = vrot.lane.b32.xlu0 %v423, 64
    %v434 = vpop.permute.xlu0 %433
    %435 = vrot.lane.b32.xlu0 %v424, 64
    %v436 = vpop.permute.xlu0 %435
    %437 = vrot.lane.b32.xlu0 %v425, 64
    %v438 = vpop.permute.xlu0 %437
    %439 = vrot.lane.b32.xlu0 %v426, 64
    %v440 = vpop.permute.xlu0 %439
    %441 = vrot.lane.b32.xlu0 %v427, 64
    %v442 = vpop.permute.xlu0 %441
    %443 = vrot.lane.b32.xlu0 %v428, 64
    %v444 = vpop.permute.xlu0 %443
    %v447 = vsel %vm297, %v381, %v430
    %v451 = vsel %vm297, %v382, %v432
    %v455 = vsel %vm297, %v383, %v434
    %v459 = vsel %vm297, %v384, %v436
    %v463 = vsel %vm297, %v385, %v438
    %v467 = vsel %vm297, %v386, %v440
    %v471 = vsel %vm297, %v387, %v442
    %v475 = vsel %vm297, %v388, %v444
    %v477 = vpack.c.bf16 %v348, %v346
    %478 = vmatpush.bf16.msra.mxu0 %v475
    %479 = vmatpush.bf16.msra.mxu0 %v471
    %480 = vmatpush.bf16.msra.mxu0 %v467
    %481 = vmatpush.bf16.msra.mxu0 %v463
    %482 = vmatpush.bf16.msra.mxu0 %v459
    %483 = vmatpush.bf16.msra.mxu0 %v455
    %484 = vmatpush.bf16.msra.mxu0 %v451
    %485 = vmatpush.bf16.msra.mxu0 %v447
    %486 = vmatmul.bf16.gmra.mxu0 %v477
    %v487 = vpop.f32.mrf.mxu0
    %v488 = vadd.f32 0.0, %v487
    %v489 = vpop.f32.mrf.mxu0
    %v490 = vadd.f32 0.0, %v489
    %491 = vdwg.mxu0
    %494 = vrot.lane.b32.xlu0 %v488, 64
    %v495 = vpop.permute.xlu0 %494
    %496 = vrot.lane.b32.xlu0 %v490, 64
    %v497 = vpop.permute.xlu0 %496
    %v500 = vrcp.pop %v495
    %v501 = vmul.f32 %v495, %v500
    %v502 = vsub.f32 1.0, %v501
    %v503 = vmul.f32 %v500, %v502
    %v504 = vadd.f32 %v500, %v503
    %vm505 = vweird.f32 %v495
    %vm506 = vweird.f32 %v500
    %vm507 = vmor %vm505, %vm506
    %v508 = vsel %vm507, %v500, %v504
    %v509 = vand.u32 2147483647, %v495
    %vm510 = vcmp.eq.f32.partialorder %v509, 8.507059e+37
    %v511 = vand.u32 %v495, 2147483648
    %v512 = vor.u32 1.1754944e-38, %v511
    %v513 = vsel %vm510, %v512, %v508
    %v514 = vmul.f32 %v488, %v513
    %v515 = vrcp.pop %v497
    %v516 = vmul.f32 %v497, %v515
    %v517 = vsub.f32 1.0, %v516
    %v518 = vmul.f32 %v515, %v517
    %v519 = vadd.f32 %v515, %v518
    %vm520 = vweird.f32 %v497
    %vm521 = vweird.f32 %v515
    %vm522 = vmor %vm520, %vm521
    %v523 = vsel %vm522, %v515, %v519
    %v524 = vand.u32 2147483647, %v497
    %vm525 = vcmp.eq.f32.partialorder %v524, 8.507059e+37
    %v526 = vand.u32 %v497, 2147483648
    %v527 = vor.u32 1.1754944e-38, %v526
    %v528 = vsel %vm525, %v527, %v523
    %v529 = vmul.f32 %v490, %v528
    %v530 = vpack.c.bf16 %v529, %v514
    %v532 = vperm.slane %v30, 0
    %534 = vrot.lane.b32.xlu0 %v64, 64
    %v535 = vpop.permute.xlu0 %534
    %536 = vrot.lane.b32.xlu0 %v66, 64
    %v537 = vpop.permute.xlu0 %536
    %v539 = vsel %vm297, %v530, 0
    %v542 = vsel %vm297, %v535, 0
    %v545 = vsel %vm297, %v537, 0
    %547 = vmatpush.bf16.xpose.msra.mxu0 0
    %548 = vmatpush.bf16.xpose.msra.mxu0 0
    %549 = vmatpush.bf16.xpose.msra.mxu0 0
    %550 = vmatpush.bf16.xpose.msra.mxu0 0
    %551 = vmatpush.bf16.xpose.msra.mxu0 0
    %552 = vmatpush.bf16.xpose.msra.mxu0 0
    %553 = vmatpush.bf16.xpose.msra.mxu0 %v545
    %554 = vmatpush.bf16.xpose.msra.mxu0 %v542
    %555 = vmatmul.bf16.gmra.mxu0 %v539
    %v556 = vpop.f32.mrf.mxu0
    %v557 = vadd.f32 %v532, %v556
    %v558 = vpop.f32.mrf.mxu0
    %v559 = vadd.f32 %v532, %v558
    %560 = vdwg.mxu0
    %v561 = vadd.f32 %v22, %v557
    %v562 = vadd.f32 %v23, %v559
    %v563 = vpack.c.bf16 %v562, %v561
    %v565 = vsel %vm71, %v563, 0
    %567 = vmatpush.bf16.msra.mxu0 0
    %568 = vmatpush.bf16.msra.mxu0 0
    %569 = vmatpush.bf16.msra.mxu0 0
    %570 = vmatpush.bf16.msra.mxu0 0
    %571 = vmatpush.bf16.msra.mxu0 0
    %572 = vmatpush.bf16.msra.mxu0 0
    %573 = vmatpush.bf16.msra.mxu0 %v65
    %574 = vmatpush.bf16.msra.mxu0 %v63
    %575 = vmatmul.bf16.gmra.mxu0 %v565
    %v576 = vpop.f32.mrf.mxu0
    %v577 = vadd.f32 0.0, %v576
    %v578 = vpop.f32.mrf.mxu0
    %v579 = vadd.f32 0.0, %v578
    %580 = vdwg.mxu0
    %v581 = vpack.c.bf16 %v577, %v577
    %v582 = vpack.c.bf16 %v579, %v579
    %v583 = vpack.c.bf16 %v107, %v107
    %v584 = vpack.c.bf16 %v109, %v109
    %v587 = vunpack.c.l.b16 %v581
    %v588 = vunpack.c.l.b16 %v582
    %v589 = vpack.c.b16 %v588, %v587
    %v591 = vunpack.c.l.bf16 %v589
    %v592 = vunpack.c.h.bf16 %v589
    %v593 = vmul.f32 %v591, %v161
    %v594 = vmul.f32 %v592, %v163
    %v595 = vmul.f32 %v591, %v165
    %v596 = vmul.f32 %v592, %v167
    %v597 = vmul.f32 %v591, %v169
    %v598 = vmul.f32 %v592, %v171
    %v599 = vmul.f32 %v591, %v173
    %v600 = vmul.f32 %v592, %v175
    %v601 = vmul.f32 %v591, %v177
    %v602 = vmul.f32 %v592, %v179
    %v603 = vmul.f32 %v591, %v181
    %v604 = vmul.f32 %v592, %v183
    %v605 = vmul.f32 %v591, %v185
    %v606 = vmul.f32 %v592, %v187
    %v607 = vmul.f32 %v591, %v189
    %v608 = vmul.f32 %v592, %v191
    %v609 = vpack.c.bf16 %v594, %v593
    %v610 = vpack.c.bf16 %v596, %v595
    %v611 = vpack.c.bf16 %v598, %v597
    %v612 = vpack.c.bf16 %v600, %v599
    %v613 = vpack.c.bf16 %v602, %v601
    %v614 = vpack.c.bf16 %v604, %v603
    %v615 = vpack.c.bf16 %v606, %v605
    %v616 = vpack.c.bf16 %v608, %v607
    %v619 = vunpack.c.l.b16 %v583
    %v620 = vunpack.c.l.b16 %v584
    %v621 = vpack.c.b16 %v620, %v619
    %v623 = vunpack.c.l.bf16 %v621
    %v624 = vunpack.c.h.bf16 %v621
    %v625 = vmul.f32 %v623, %v128
    %v626 = vmul.f32 %v624, %v129
    %v627 = vmul.f32 %v623, %v130
    %v628 = vmul.f32 %v624, %v131
    %v629 = vmul.f32 %v623, %v132
    %v630 = vmul.f32 %v624, %v133
    %v631 = vmul.f32 %v623, %v134
    %v632 = vmul.f32 %v624, %v135
    %v633 = vmul.f32 %v623, %v136
    %v634 = vmul.f32 %v624, %v137
    %v635 = vmul.f32 %v623, %v138
    %v636 = vmul.f32 %v624, %v139
    %v637 = vmul.f32 %v623, %v140
    %v638 = vmul.f32 %v624, %v141
    %v639 = vmul.f32 %v623, %v142
    %v640 = vmul.f32 %v624, %v143
    %v641 = vpack.c.bf16 %v625, %v625
    %v642 = vpack.c.bf16 %v626, %v626
    %v643 = vpack.c.bf16 %v627, %v627
    %v644 = vpack.c.bf16 %v628, %v628
    %v645 = vpack.c.bf16 %v629, %v629
    %v646 = vpack.c.bf16 %v630, %v630
    %v647 = vpack.c.bf16 %v631, %v631
    %v648 = vpack.c.bf16 %v632, %v632
    %v649 = vpack.c.bf16 %v633, %v633
    %v650 = vpack.c.bf16 %v634, %v634
    %v651 = vpack.c.bf16 %v635, %v635
    %v652 = vpack.c.bf16 %v636, %v636
    %v653 = vpack.c.bf16 %v637, %v637
    %v654 = vpack.c.bf16 %v638, %v638
    %v655 = vpack.c.bf16 %v639, %v639
    %v656 = vpack.c.bf16 %v640, %v640
    %v657 = vpack.c.bf16 %v579, %v577
    %666 = vrot.lane.b32.xlu0 %v609, 64
    %v667 = vpop.permute.xlu0 %666
    %668 = vrot.lane.b32.xlu0 %v610, 64
    %v669 = vpop.permute.xlu0 %668
    %670 = vrot.lane.b32.xlu0 %v611, 64
    %v671 = vpop.permute.xlu0 %670
    %672 = vrot.lane.b32.xlu0 %v612, 64
    %v673 = vpop.permute.xlu0 %672
    %674 = vrot.lane.b32.xlu0 %v613, 64
    %v675 = vpop.permute.xlu0 %674
    %676 = vrot.lane.b32.xlu0 %v614, 64
    %v677 = vpop.permute.xlu0 %676
    %678 = vrot.lane.b32.xlu0 %v615, 64
    %v679 = vpop.permute.xlu0 %678
    %680 = vrot.lane.b32.xlu0 %v616, 64
    %v681 = vpop.permute.xlu0 %680
    %v683 = vsel %vm297, %v657, 0
    %v686 = vsel %vm297, %v667, 0
    %v689 = vsel %vm297, %v669, 0
    %v692 = vsel %vm297, %v671, 0
    %v695 = vsel %vm297, %v673, 0
    %v698 = vsel %vm297, %v675, 0
    %v701 = vsel %vm297, %v677, 0
    %v704 = vsel %vm297, %v679, 0
    %v707 = vsel %vm297, %v681, 0
    %709 = vmatpush.bf16.xpose.msra.mxu0 %v707
    %710 = vmatpush.bf16.xpose.msra.mxu0 %v704
    %711 = vmatpush.bf16.xpose.msra.mxu0 %v701
    %712 = vmatpush.bf16.xpose.msra.mxu0 %v698
    %713 = vmatpush.bf16.xpose.msra.mxu0 %v695
    %714 = vmatpush.bf16.xpose.msra.mxu0 %v692
    %715 = vmatpush.bf16.xpose.msra.mxu0 %v689
    %716 = vmatpush.bf16.xpose.msra.mxu0 %v686
    %717 = vmatmul.bf16.gmra.mxu0 %v683
    %v718 = vpop.f32.mrf.mxu0
    %v719 = vadd.f32 %v47, %v718
    %v720 = vpop.f32.mrf.mxu0
    %v721 = vadd.f32 %v48, %v720
    %722 = vdwg.mxu0
    %723 = vmax.xlane.f32.xlu0 %v719
    %v724 = vpop.xlane.xlu0 %723
    %725 = vmax.xlane.f32.xlu0 %v721
    %v726 = vpop.xlane.xlu0 %725
    %v727 = vsub.f32 %v719, %v724
    %v728 = vsub.f32 %v721, %v726
    %v729 = vmul.f32 %v727, 1.442695
    %v730 = vpow.pop %v729
    %v731 = vmul.f32 %v728, 1.442695
    %v732 = vpow.pop %v731
    %v749 = vunpack.c.l.b16 %v641
    %v750 = vunpack.c.l.b16 %v642
    %v751 = vunpack.c.l.b16 %v643
    %v752 = vunpack.c.l.b16 %v644
    %v753 = vunpack.c.l.b16 %v645
    %v754 = vunpack.c.l.b16 %v646
    %v755 = vunpack.c.l.b16 %v647
    %v756 = vunpack.c.l.b16 %v648
    %v757 = vunpack.c.l.b16 %v649
    %v758 = vunpack.c.l.b16 %v650
    %v759 = vunpack.c.l.b16 %v651
    %v760 = vunpack.c.l.b16 %v652
    %v761 = vunpack.c.l.b16 %v653
    %v762 = vunpack.c.l.b16 %v654
    %v763 = vunpack.c.l.b16 %v655
    %v764 = vunpack.c.l.b16 %v656
    %v765 = vpack.c.b16 %v750, %v749
    %v766 = vpack.c.b16 %v752, %v751
    %v767 = vpack.c.b16 %v754, %v753
    %v768 = vpack.c.b16 %v756, %v755
    %v769 = vpack.c.b16 %v758, %v757
    %v770 = vpack.c.b16 %v760, %v759
    %v771 = vpack.c.b16 %v762, %v761
    %v772 = vpack.c.b16 %v764, %v763
    %v774 = vsel %vm297, %v765, %v430
    %v777 = vsel %vm297, %v766, %v432
    %v780 = vsel %vm297, %v767, %v434
    %v783 = vsel %vm297, %v768, %v436
    %v786 = vsel %vm297, %v769, %v438
    %v789 = vsel %vm297, %v770, %v440
    %v792 = vsel %vm297, %v771, %v442
    %v795 = vsel %vm297, %v772, %v444
    %v797 = vpack.c.bf16 %v732, %v730
    %798 = vmatpush.bf16.msra.mxu0 %v795
    %799 = vmatpush.bf16.msra.mxu0 %v792
    %800 = vmatpush.bf16.msra.mxu0 %v789
    %801 = vmatpush.bf16.msra.mxu0 %v786
    %802 = vmatpush.bf16.msra.mxu0 %v783
    %803 = vmatpush.bf16.msra.mxu0 %v780
    %804 = vmatpush.bf16.msra.mxu0 %v777
    %805 = vmatpush.bf16.msra.mxu0 %v774
    %806 = vmatmul.bf16.gmra.mxu0 %v797
    %v807 = vpop.f32.mrf.mxu0
    %v808 = vadd.f32 0.0, %v807
    %v809 = vpop.f32.mrf.mxu0
    %v810 = vadd.f32 0.0, %v809
    %811 = vdwg.mxu0
    %814 = vrot.lane.b32.xlu0 %v808, 64
    %v815 = vpop.permute.xlu0 %814
    %816 = vrot.lane.b32.xlu0 %v810, 64
    %v817 = vpop.permute.xlu0 %816
    %v820 = vrcp.pop %v815
    %v821 = vmul.f32 %v815, %v820
    %v822 = vsub.f32 1.0, %v821
    %v823 = vmul.f32 %v820, %v822
    %v824 = vadd.f32 %v820, %v823
    %vm825 = vweird.f32 %v815
    %vm826 = vweird.f32 %v820
    %vm827 = vmor %vm825, %vm826
    %v828 = vsel %vm827, %v820, %v824
    %v829 = vand.u32 2147483647, %v815
    %vm830 = vcmp.eq.f32.partialorder %v829, 8.507059e+37
    %v831 = vand.u32 %v815, 2147483648
    %v832 = vor.u32 1.1754944e-38, %v831
    %v833 = vsel %vm830, %v832, %v828
    %v834 = vmul.f32 %v808, %v833
    %v835 = vrcp.pop %v817
    %v836 = vmul.f32 %v817, %v835
    %v837 = vsub.f32 1.0, %v836
    %v838 = vmul.f32 %v835, %v837
    %v839 = vadd.f32 %v835, %v838
    %vm840 = vweird.f32 %v817
    %vm841 = vweird.f32 %v835
    %vm842 = vmor %vm840, %vm841
    %v843 = vsel %vm842, %v835, %v839
    %v844 = vand.u32 2147483647, %v817
    %vm845 = vcmp.eq.f32.partialorder %v844, 8.507059e+37
    %v846 = vand.u32 %v817, 2147483648
    %v847 = vor.u32 1.1754944e-38, %v846
    %v848 = vsel %vm845, %v847, %v843
    %v849 = vmul.f32 %v810, %v848
    %v850 = vpack.c.bf16 %v849, %v834
    %v852 = vsel %vm297, %v850, 0
    %854 = vmatpush.bf16.xpose.msra.mxu0 0
    %855 = vmatpush.bf16.xpose.msra.mxu0 0
    %856 = vmatpush.bf16.xpose.msra.mxu0 0
    %857 = vmatpush.bf16.xpose.msra.mxu0 0
    %858 = vmatpush.bf16.xpose.msra.mxu0 0
    %859 = vmatpush.bf16.xpose.msra.mxu0 0
    %860 = vmatpush.bf16.xpose.msra.mxu0 %v545
    %861 = vmatpush.bf16.xpose.msra.mxu0 %v542
    %862 = vmatmul.bf16.gmra.mxu0 %v852
    %v863 = vpop.f32.mrf.mxu0
    %v864 = vadd.f32 %v532, %v863
    %v865 = vpop.f32.mrf.mxu0
    %v866 = vadd.f32 %v532, %v865
    %867 = vdwg.mxu0
    %868 = vst.msk [vmem:[#allocation2] sm:$0xff] %vm71, %v864
    %869 = vst.msk [vmem:[#allocation2 + $0x8] sm:$0xff] %vm71, %v866
    // Predicated region
    $region22: #{tpu_custom_call.1} parent=1 // pred_check
      _
    $region23: #{tpu_custom_call.1} parent=1 // pred_check_branch
      %871 = sbr.rel (0) target = $region25
    $region24: #{tpu_custom_call.1} parent=1 // pred_region
      %873 = vsyncadd [#allocation3], 0
      %s874 = sshll.u32 [#allocation2], 4
      %s875 = int_to_ptr.vmem [resolvable:$true] %s874
      %s876 = sshll.u32 %s5, 4
      %s877 = int_to_ptr.hbm [resolvable:$true] %s876
      %882 = dma.vmem_to_hbm [thread:$0]  %s875, 256, %s877, [#allocation3], 128, 128, 8
    $region25: #{tpu_custom_call.1} parent=1 // pred_fallthru
      _
    // Predicated region
    $region26: #{tpu_custom_call.1} parent=1 // pred_check
      _
    $region27: #{tpu_custom_call.1} parent=1 // pred_check_branch
      %884 = sbr.rel (0) target = $region29
    $region28: #{tpu_custom_call.1} parent=1 // pred_region
      %886 = dma.done [#allocation3], 256
    $region29: #{tpu_custom_call.1} parent=1 // pred_fallthru
      _
    %887 = vsyncpa [#allocation3], 1

</llo_original>
